<compile_context>
chip_gen: v7x
topology: tpu7x:2x2x1
jax: 0.10.0
libtpu: 0.0.40
codegen_flags: <defaults>
</compile_context>

<pallas_src>
import jax
import jax.numpy as jnp
from jax.experimental import pallas as pl
from jax.experimental.pallas import tpu as pltpu


def _round_up(a, m):
    return (a + m - 1) // m * m


def _mlp_kernel(xt_ref, w1_ref, bw_ref, b2_ref, o_ref, acc_ref, z_ref):
    # Grid: (batch tile i, layer-1 output-feature tile m, input-feature tile k).
    m = pl.program_id(1)
    k = pl.program_id(2)
    nm = pl.num_programs(1)
    nk = pl.num_programs(2)

    # Layer-1 partial product on the MXU: (TM, TK)bf16 @ (TK, TB)bf16 -> f32.
    partial = jnp.dot(w1_ref[...], xt_ref[...], preferred_element_type=jnp.float32)

    @pl.when(k == 0)
    def _init():
        # Fold the layer-1 bias into the init: saves a full zero-store + add pass.
        acc_ref[...] = partial + bw_ref[:, 0:1]

    @pl.when(k > 0)
    def _accumulate():
        acc_ref[...] += partial

    @pl.when(k == nk - 1)
    def _m_tile_epilogue():
        # ReLU + layer 2 for this M tile: VPU multiply by w2 plus a sublane
        # (axis-0) reduction — MXU stays free — result is lane-dense (1, TB).
        h = jnp.maximum(acc_ref[...], 0.0)
        zp = jnp.sum(h * bw_ref[:, 1:2], axis=0, keepdims=True)

        @pl.when(m == 0)
        def _z_init():
            z_ref[...] = zp + b2_ref[0, 0]

        @pl.when(m > 0)
        def _z_accumulate():
            z_ref[...] += zp

        @pl.when(m == nm - 1)
        def _store():
            # Exact sigmoid (exp + divide): it acts on a (1, TB) tile off the
            # critical path, so exactness is essentially free.
            z = z_ref[...]
            p = 1.0 / (1.0 + jnp.exp(-z))
            o_ref[...] = p[None].astype(o_ref.dtype)  # (1, 1, TB) lane-dense


def binary_classifier_forward(x, w1, b1, w2, b2):
    """Forward pass of BinaryClassifier.

    x : (B, H) f32
    w1: (H, H) f32, PyTorch layout (out, in)
    b1: (H,)   f32
    w2: (1, H) f32, PyTorch layout (out, in)
    b2: (1,)   f32
    Returns sigmoid(relu(x @ w1.T + b1) @ w2.T + b2), shape (B, 1) f32.
    """
    B, H = x.shape

    # Batch tile: lane-aligned (multiple of 128).  For B >= 256 use at least
    # two tiles so the "parallel" batch axis can feed both v7x TensorCores.
    if B >= 256:
        TB = min(512, _round_up(-(-B // 2), 128))
    else:
        TB = _round_up(B, 128)
    B_pad = _round_up(B, TB)
    nb = B_pad // TB

    # Feature tiling: pad H to a multiple of 128, bounded TM = TK tile.
    Hp = _round_up(H, 128)
    if Hp % 512 == 0:
        TH = 512
    elif Hp % 256 == 0:
        TH = 256
    else:
        TH = 128
    nm = nk = Hp // TH

    # Batch-on-lanes layout: transpose + zero-pad x once in the wrapper (layout
    # plumbing outside the pipeline); cast MXU operand streams to bf16 (f32 acc).
    # TODO(synk): for very large B the x^T materialization could be avoided by
    # contracting on x's last dim in-kernel via lax.dot_general.
    xt = jnp.pad(x.T.astype(jnp.bfloat16), ((0, Hp - H), (0, B_pad - B)))
    w1_bf = jnp.pad(w1.astype(jnp.bfloat16), ((0, Hp - H), (0, Hp - H)))
    bw = jnp.stack(
        [
            jnp.pad(b1.astype(jnp.float32), (0, Hp - H)),
            jnp.pad(w2.reshape(-1).astype(jnp.float32), (0, Hp - H)),
        ],
        axis=1,
    )  # (Hp, 2): column 0 = b1, column 1 = w2
    b2_2d = b2.reshape(1, 1).astype(jnp.float32)

    out = pl.pallas_call(
        _mlp_kernel,
        out_shape=jax.ShapeDtypeStruct((nb, 1, TB), jnp.float32),
        grid_spec=pltpu.PrefetchScalarGridSpec(
            num_scalar_prefetch=0,
            grid=(nb, nm, nk),
            in_specs=[
                pl.BlockSpec((TH, TB), lambda i, m, k: (k, i)),  # x^T tile (streams)
                pl.BlockSpec((TH, TH), lambda i, m, k: (m, k)),  # W1 tile
                pl.BlockSpec((TH, 2), lambda i, m, k: (m, 0)),   # [b1 | w2] tile
                pl.BlockSpec(memory_space=pltpu.SMEM),           # b2 scalar in SMEM
            ],
            out_specs=pl.BlockSpec((1, 1, TB), lambda i, m, k: (i, 0, 0)),
            scratch_shapes=[
                pltpu.VMEM((TH, TB), jnp.float32),  # layer-1 accumulator (M-tiled)
                pltpu.VMEM((1, TB), jnp.float32),   # layer-2 pre-activation accumulator
            ],
        ),
        compiler_params=pltpu.CompilerParams(
            dimension_semantics=("parallel", "arbitrary", "arbitrary"),
            # Tiles are only a few MiB total; 32 MiB is safe on v5e/v6e/v7x.
            vmem_limit_bytes=32 * 1024 * 1024,
        ),
        cost_estimate=pl.CostEstimate(
            flops=2 * B_pad * Hp * Hp + 4 * B_pad * Hp,
            transcendentals=B_pad,
            bytes_accessed=(nb * Hp * Hp + Hp * B_pad) * 2
            + (nb * Hp * 2 + B_pad + 1) * 4,
        ),
    )(xt, w1_bf, bw, b2_2d)

    # (nb, 1, TB) lane-dense slab -> (B, 1), dropping batch padding.
    return out.reshape(B_pad)[:B].reshape(B, 1)


def init_params(key, h_feats):
    """Deterministic synthetic parameters with exact nn.Linear (out, in) shapes."""
    k1, k2, k3, k4 = jax.random.split(key, 4)
    s = 1.0 / jnp.sqrt(h_feats)
    w1 = jax.random.uniform(k1, (h_feats, h_feats), jnp.float32, -s, s)  # (out, in)
    b1 = jax.random.uniform(k2, (h_feats,), jnp.float32, -s, s)
    w2 = jax.random.uniform(k3, (1, h_feats), jnp.float32, -s, s)        # (out, in)
    b2 = jax.random.uniform(k4, (1,), jnp.float32, -s, s)
    return w1, b1, w2, b2


if __name__ == "__main__":
    key = jax.random.PRNGKey(0)
    kx, kp = jax.random.split(key)

    H = 32   # h_feats
    B = 8    # batch of feature vectors

    x = jax.random.normal(kx, (B, H), jnp.float32)
    w1, b1, w2, b2 = init_params(kp, H)

    out = jax.block_until_ready(binary_classifier_forward(x, w1, b1, w2, b2))

    # Pure-JAX f32 reference (same semantics as the PyTorch forward); tolerance
    # covers the bf16 MXU operand streams.
    ref = jax.nn.sigmoid(jnp.maximum(x @ w1.T + b1, 0.0) @ w2.T + b2)
    assert out.shape == (B, 1)
    assert jnp.allclose(out, ref, atol=2e-2, rtol=2e-2)

    print("KERNEL_OK")
</pallas_src>

<mosaic_0001>
module attributes {stable_mosaic.version = 11 : i64} {
  func.func @_mlp_kernel(%arg0: i32, %arg1: i32, %arg2: i32, %arg3: memref<128x128xbf16, #tpu.memory_space<vmem>>, %arg4: memref<128x128xbf16, #tpu.memory_space<vmem>>, %arg5: memref<128x2xf32, #tpu.memory_space<vmem>>, %arg6: memref<1x1xf32, #tpu.memory_space<smem>>, %arg7: memref<1x1x128xf32, #tpu.memory_space<vmem>>, %arg8: memref<128x128xf32, #tpu.memory_space<vmem>>, %arg9: memref<1x128xf32, #tpu.memory_space<vmem>>) attributes {dimension_semantics = [#tpu.dimension_semantics<parallel>, #tpu.dimension_semantics<arbitrary>, #tpu.dimension_semantics<arbitrary>], iteration_bounds = array<i64: 1, 1, 1>, scalar_prefetch = 0 : i64, scratch_operands = 2 : i64, tpu.core_type = #tpu.core_type<tc>, window_params = [{transform_indices = @transform_0, window_bounds = array<i64: 128, 128>}, {transform_indices = @transform_1, window_bounds = array<i64: 128, 128>}, {transform_indices = @transform_2, window_bounds = array<i64: 128, 2>}, {transform_indices = @transform_3, window_bounds = array<i64: 1, 1>}, {transform_indices = @transform_4, window_bounds = array<i64: 1, 1, 128>}]} {
    %c0 = arith.constant 0 : index
    %c0_0 = arith.constant 0 : index
    %0 = vector.load %arg4[%c0, %c0_0] : memref<128x128xbf16, #tpu.memory_space<vmem>>, vector<128x128xbf16>
    %c0_1 = arith.constant 0 : index
    %c0_2 = arith.constant 0 : index
    %1 = vector.load %arg3[%c0_1, %c0_2] : memref<128x128xbf16, #tpu.memory_space<vmem>>, vector<128x128xbf16>
    %cst = arith.constant dense<0.000000e+00> : vector<128x128xf32>
    %2 = tpu.matmul %0, %1, %cst {dimension_numbers = #tpu.dot_dimension_numbers<[1], [0], [0], [1], [0, 0, 1, 1], [], []>} : vector<128x128xbf16>, vector<128x128xbf16>, vector<128x128xf32> -> vector<128x128xf32>
    %c0_i32 = arith.constant 0 : i32
    %3 = arith.cmpi eq, %arg2, %c0_i32 : i32
    %4 = arith.extui %3 : i1 to i32
    %c0_i32_3 = arith.constant 0 : i32
    %5 = arith.cmpi ne, %4, %c0_i32_3 : i32
    scf.if %5 {
      %c0_8 = arith.constant 0 : index
      %c0_9 = arith.constant 0 : index
      %12 = vector.load %arg5[%c0_8, %c0_9] : memref<128x2xf32, #tpu.memory_space<vmem>>, vector<128x1xf32>
      %13 = vector.broadcast %12 : vector<128x1xf32> to vector<128x128xf32>
      %14 = arith.addf %2, %13 : vector<128x128xf32>
      %c0_10 = arith.constant 0 : index
      %c0_11 = arith.constant 0 : index
      %15 = vector.load %arg8[%c0_10, %c0_11] : memref<128x128xf32, #tpu.memory_space<vmem>>, vector<128x128xf32>
      tpu.vector_store %arg8[%c0_10, %c0_11], %14 {strides = array<i32>} : memref<128x128xf32, #tpu.memory_space<vmem>>, vector<128x128xf32>,
    } else {
    }
    %c0_i32_4 = arith.constant 0 : i32
    %6 = arith.cmpi sgt, %arg2, %c0_i32_4 : i32
    %7 = arith.extui %6 : i1 to i32
    %c0_i32_5 = arith.constant 0 : i32
    %8 = arith.cmpi ne, %7, %c0_i32_5 : i32
    scf.if %8 {
      %c0_8 = arith.constant 0 : index
      %c0_9 = arith.constant 0 : index
      %12 = vector.load %arg8[%c0_8, %c0_9] : memref<128x128xf32, #tpu.memory_space<vmem>>, vector<128x128xf32>
      %13 = arith.addf %12, %2 : vector<128x128xf32>
      %c0_10 = arith.constant 0 : index
      %c0_11 = arith.constant 0 : index
      %14 = vector.load %arg8[%c0_10, %c0_11] : memref<128x128xf32, #tpu.memory_space<vmem>>, vector<128x128xf32>
      tpu.vector_store %arg8[%c0_10, %c0_11], %13 {strides = array<i32>} : memref<128x128xf32, #tpu.memory_space<vmem>>, vector<128x128xf32>,
    } else {
    }
    %c0_i32_6 = arith.constant 0 : i32
    %9 = arith.cmpi eq, %arg2, %c0_i32_6 : i32
    %10 = arith.extui %9 : i1 to i32
    %c0_i32_7 = arith.constant 0 : i32
    %11 = arith.cmpi ne, %10, %c0_i32_7 : i32
    scf.if %11 {
      %c0_8 = arith.constant 0 : index
      %c0_9 = arith.constant 0 : index
      %12 = vector.load %arg8[%c0_8, %c0_9] : memref<128x128xf32, #tpu.memory_space<vmem>>, vector<128x128xf32>
      %cst_10 = arith.constant 0.000000e+00 : f32
      %13 = vector.broadcast %cst_10 : f32 to vector<128x128xf32>
      %14 = arith.maximumf %12, %13 : vector<128x128xf32>
      %c0_11 = arith.constant 0 : index
      %c1 = arith.constant 1 : index
      %15 = vector.load %arg5[%c0_11, %c1] : memref<128x2xf32, #tpu.memory_space<vmem>>, vector<128x1xf32>
      %16 = vector.broadcast %15 : vector<128x1xf32> to vector<128x128xf32>
      %17 = arith.mulf %14, %16 : vector<128x128xf32>
      %cst_12 = arith.constant dense<0.000000e+00> : vector<128xf32>
      %18 = vector.multi_reduction <add>, %17, %cst_12 [0] : vector<128x128xf32> to vector<128xf32>
      %19 = vector.shape_cast %18 : vector<128xf32> to vector<1x128xf32>
      %c0_i32_13 = arith.constant 0 : i32
      %20 = arith.cmpi eq, %arg1, %c0_i32_13 : i32
      %21 = arith.extui %20 : i1 to i32
      %c0_i32_14 = arith.constant 0 : i32
      %22 = arith.cmpi ne, %21, %c0_i32_14 : i32
      scf.if %22 {
        %c0_19 = arith.constant 0 : index
        %c0_20 = arith.constant 0 : index
        %29 = memref.load %arg6[%c0_19, %c0_20] : memref<1x1xf32, #tpu.memory_space<smem>>
        %30 = vector.broadcast %29 : f32 to vector<1x128xf32>
        %31 = arith.addf %19, %30 : vector<1x128xf32>
        %c0_21 = arith.constant 0 : index
        %c0_22 = arith.constant 0 : index
        %32 = vector.load %arg9[%c0_21, %c0_22] : memref<1x128xf32, #tpu.memory_space<vmem>>, vector<1x128xf32>
        tpu.vector_store %arg9[%c0_21, %c0_22], %31 {strides = array<i32>} : memref<1x128xf32, #tpu.memory_space<vmem>>, vector<1x128xf32>,
      } else {
      }
      %c0_i32_15 = arith.constant 0 : i32
      %23 = arith.cmpi sgt, %arg1, %c0_i32_15 : i32
      %24 = arith.extui %23 : i1 to i32
      %c0_i32_16 = arith.constant 0 : i32
      %25 = arith.cmpi ne, %24, %c0_i32_16 : i32
      scf.if %25 {
        %c0_19 = arith.constant 0 : index
        %c0_20 = arith.constant 0 : index
        %29 = vector.load %arg9[%c0_19, %c0_20] : memref<1x128xf32, #tpu.memory_space<vmem>>, vector<1x128xf32>
        %30 = arith.addf %29, %19 : vector<1x128xf32>
        %c0_21 = arith.constant 0 : index
        %c0_22 = arith.constant 0 : index
        %31 = vector.load %arg9[%c0_21, %c0_22] : memref<1x128xf32, #tpu.memory_space<vmem>>, vector<1x128xf32>
        tpu.vector_store %arg9[%c0_21, %c0_22], %30 {strides = array<i32>} : memref<1x128xf32, #tpu.memory_space<vmem>>, vector<1x128xf32>,
      } else {
      }
      %c0_i32_17 = arith.constant 0 : i32
      %26 = arith.cmpi eq, %arg1, %c0_i32_17 : i32
      %27 = arith.extui %26 : i1 to i32
      %c0_i32_18 = arith.constant 0 : i32
      %28 = arith.cmpi ne, %27, %c0_i32_18 : i32
      scf.if %28 {
        %c0_19 = arith.constant 0 : index
        %c0_20 = arith.constant 0 : index
        %29 = vector.load %arg9[%c0_19, %c0_20] : memref<1x128xf32, #tpu.memory_space<vmem>>, vector<1x128xf32>
        %cst_21 = arith.constant 0.000000e+00 : f32
        %30 = vector.broadcast %cst_21 : f32 to vector<1x128xf32>
        %31 = arith.subf %30, %29 : vector<1x128xf32>
        %32 = math.exp %31 : vector<1x128xf32>
        %cst_22 = arith.constant 1.000000e+00 : f32
        %33 = vector.broadcast %cst_22 : f32 to vector<1x128xf32>
        %34 = arith.addf %33, %32 : vector<1x128xf32>
        %cst_23 = arith.constant 1.000000e+00 : f32
        %35 = vector.broadcast %cst_23 : f32 to vector<1x128xf32>
        %36 = arith.divf %35, %34 : vector<1x128xf32>
        %37 = vector.shape_cast %36 : vector<1x128xf32> to vector<1x1x128xf32>
        %c0_24 = arith.constant 0 : index
        %c0_25 = arith.constant 0 : index
        %c0_26 = arith.constant 0 : index
        %38 = vector.load %arg7[%c0_24, %c0_25, %c0_26] : memref<1x1x128xf32, #tpu.memory_space<vmem>>, vector<1x1x128xf32>
        tpu.vector_store %arg7[%c0_24, %c0_25, %c0_26], %37 {strides = array<i32>} : memref<1x1x128xf32, #tpu.memory_space<vmem>>, vector<1x1x128xf32>,
      } else {
      }
    } else {
    }
    return
  }
  func.func @transform_0(%arg0: i32, %arg1: i32, %arg2: i32) -> (i32, i32) {
    %c0_i32 = arith.constant 0 : i32
    return %arg2, %arg0 : i32, i32
  }
  func.func @transform_1(%arg0: i32, %arg1: i32, %arg2: i32) -> (i32, i32) {
    %c0_i32 = arith.constant 0 : i32
    return %arg1, %arg2 : i32, i32
  }
  func.func @transform_2(%arg0: i32, %arg1: i32, %arg2: i32) -> (i32, i32) {
    %c0_i32 = arith.constant 0 : i32
    %c0_i32_0 = arith.constant 0 : i32
    return %arg1, %c0_i32 : i32, i32
  }
  func.func @transform_3(%arg0: i32, %arg1: i32, %arg2: i32) -> (i32, i32) {
    %c0_i32 = arith.constant 0 : i32
    %c0_i32_0 = arith.constant 0 : i32
    %c0_i32_1 = arith.constant 0 : i32
    return %c0_i32, %c0_i32_0 : i32, i32
  }
  func.func @transform_4(%arg0: i32, %arg1: i32, %arg2: i32) -> (i32, i32, i32) {
    %c0_i32 = arith.constant 0 : i32
    %c0_i32_0 = arith.constant 0 : i32
    %c0_i32_1 = arith.constant 0 : i32
    return %arg0, %c0_i32, %c0_i32_0 : i32, i32, i32
  }
}

</mosaic_0001>

<llo_original>
// kernel: tpu_custom_call.1
$region0: #{tpu_custom_call.1}
  #allocation0 [shape = 'u32[]', space=smem, size = 0x4, offset = 0x4, fixed_abs, tag = 'smem constant byte address 0x4 - core index']
  #allocation1 [shape = 'u32[144,128]{1,0:T(1,128)}', space=vmem, size = 0x12000, scoped, tag = 'internal scratch']
  #allocation2 [shape = 'f32[128,128]{1,0:T(8,128)}', space=vmem, size = 0x10000, scoped, tag = 'scratch operand']
  #allocation3 [shape = 'f32[1,128]{1,0:T(1,128)}', space=vmem, size = 0x200, scoped, tag = 'scratch operand']
  #allocation4 [shape = 'f32[1,1]{1,0:T(1,128)S(6)}', space=smem, size = 0x200, scoped, tag = 'scoped memory for tpu_custom_call.1']
  %s0 = inlined_call_operand.vmem [shape: bf16[128,128], index: 0, kind: input, shape index: {}]
  %s1 = inlined_call_operand.vmem [shape: bf16[128,128], index: 1, kind: input, shape index: {}]
  %s2 = inlined_call_operand.vmem [shape: f32[128,2], index: 2, kind: input, shape index: {}]
  %s3 = inlined_call_operand.<no memory space> [shape: f32[1,1], index: 3, kind: input, shape index: {}]
  %s4 = inlined_call_operand.hbm [shape: f32[1,1,128], index: 4, kind: output, shape index: {}]
  %s5 = sld [smem:[#allocation0]]
  $region50: #{tpu_custom_call.1} parent=0
    _
  %s7 = ssub.s32 1, %s5
  %s8 = scalar_select 0, %s7, %s5
  %9 = sst [smem:[#allocation4]] %s3
  $region1: #{tpu_custom_call.1} parent=0
    #allocation5 [shape = 'u8[512]{0}', space=vmem, size = 0x400, scoped, tag = 'output window, operand 0, single buffered']
    #allocation6 [shape = 's32[1]{0}', space=sflag, size = 0x4, scoped, tag = 'scoped memory for tpu_custom_call.1']
    %10 = vsyncpa [#allocation6], 0
    // Predicated region
    $region2: #{tpu_custom_call.1} parent=1 // pred_check
      _
    $region3: #{tpu_custom_call.1} parent=1 // pred_check_branch
      %12 = sbr.rel (0) target = $region5
    $region4: #{tpu_custom_call.1} parent=1 // pred_region
      _
    $region5: #{tpu_custom_call.1} parent=1 // pred_fallthru
      _
    // Predicated region
    $region6: #{tpu_custom_call.1} parent=1 // pred_check
      _
    $region7: #{tpu_custom_call.1} parent=1 // pred_check_branch
      %14 = sbr.rel (0) target = $region9
    $region8: #{tpu_custom_call.1} parent=1 // pred_region
      _
    $region9: #{tpu_custom_call.1} parent=1 // pred_fallthru
      _
    // Predicated region
    $region10: #{tpu_custom_call.1} parent=1 // pred_check
      _
    $region11: #{tpu_custom_call.1} parent=1 // pred_check_branch
      %16 = sbr.rel (0) target = $region13
    $region12: #{tpu_custom_call.1} parent=1 // pred_region
      _
    $region13: #{tpu_custom_call.1} parent=1 // pred_fallthru
      _
    // Predicated region
    $region14: #{tpu_custom_call.1} parent=1 // pred_check
      _
    $region15: #{tpu_custom_call.1} parent=1 // pred_check_branch
      %18 = sbr.rel (0) target = $region17
    $region16: #{tpu_custom_call.1} parent=1 // pred_region
      _
    $region17: #{tpu_custom_call.1} parent=1 // pred_fallthru
      _
    %v20 = vld [vmem:[%s1] sm:$0xf]
    %v21 = vld [vmem:[%s1 + $0x4] sm:$0xf]
    %v22 = vld [vmem:[%s1 + $0x8] sm:$0xf]
    %v23 = vld [vmem:[%s1 + $0xc] sm:$0xf]
    %v24 = vld [vmem:[%s1 + $0x10] sm:$0xf]
    %v25 = vld [vmem:[%s1 + $0x14] sm:$0xf]
    %v26 = vld [vmem:[%s1 + $0x18] sm:$0xf]
    %v27 = vld [vmem:[%s1 + $0x1c] sm:$0xf]
    %v28 = vld [vmem:[%s1 + $0x20] sm:$0xf]
    %v29 = vld [vmem:[%s1 + $0x24] sm:$0xf]
    %v30 = vld [vmem:[%s1 + $0x28] sm:$0xf]
    %v31 = vld [vmem:[%s1 + $0x2c] sm:$0xf]
    %v32 = vld [vmem:[%s1 + $0x30] sm:$0xf]
    %v33 = vld [vmem:[%s1 + $0x34] sm:$0xf]
    %v34 = vld [vmem:[%s1 + $0x38] sm:$0xf]
    %v35 = vld [vmem:[%s1 + $0x3c] sm:$0xf]
    %v36 = vld [vmem:[%s0] sm:$0xf]
    %v37 = vld [vmem:[%s0 + $0x4] sm:$0xf]
    %v38 = vld [vmem:[%s0 + $0x8] sm:$0xf]
    %v39 = vld [vmem:[%s0 + $0xc] sm:$0xf]
    %v40 = vld [vmem:[%s0 + $0x10] sm:$0xf]
    %v41 = vld [vmem:[%s0 + $0x14] sm:$0xf]
    %v42 = vld [vmem:[%s0 + $0x18] sm:$0xf]
    %v43 = vld [vmem:[%s0 + $0x1c] sm:$0xf]
    %v44 = vld [vmem:[%s0 + $0x20] sm:$0xf]
    %v45 = vld [vmem:[%s0 + $0x24] sm:$0xf]
    %v46 = vld [vmem:[%s0 + $0x28] sm:$0xf]
    %v47 = vld [vmem:[%s0 + $0x2c] sm:$0xf]
    %v48 = vld [vmem:[%s0 + $0x30] sm:$0xf]
    %v49 = vld [vmem:[%s0 + $0x34] sm:$0xf]
    %v50 = vld [vmem:[%s0 + $0x38] sm:$0xf]
    %v51 = vld [vmem:[%s0 + $0x3c] sm:$0xf]
    %v68 = vunpack.c.l.b16 %v20
    %v69 = vunpack.c.l.b16 %v21
    %v70 = vunpack.c.l.b16 %v22
    %v71 = vunpack.c.l.b16 %v23
    %v72 = vunpack.c.l.b16 %v24
    %v73 = vunpack.c.l.b16 %v25
    %v74 = vunpack.c.l.b16 %v26
    %v75 = vunpack.c.l.b16 %v27
    %v76 = vunpack.c.l.b16 %v28
    %v77 = vunpack.c.l.b16 %v29
    %v78 = vunpack.c.l.b16 %v30
    %v79 = vunpack.c.l.b16 %v31
    %v80 = vunpack.c.l.b16 %v32
    %v81 = vunpack.c.l.b16 %v33
    %v82 = vunpack.c.l.b16 %v34
    %v83 = vunpack.c.l.b16 %v35
    %v84 = vpack.c.b16 %v69, %v68
    %v85 = vpack.c.b16 %v71, %v70
    %v86 = vpack.c.b16 %v73, %v72
    %v87 = vpack.c.b16 %v75, %v74
    %v88 = vpack.c.b16 %v77, %v76
    %v89 = vpack.c.b16 %v79, %v78
    %v90 = vpack.c.b16 %v81, %v80
    %v91 = vpack.c.b16 %v83, %v82
    %v116 = vunpack.c.l.b16 %v36
    %v117 = vunpack.c.l.b16 %v37
    %v118 = vunpack.c.l.b16 %v38
    %v119 = vunpack.c.l.b16 %v39
    %v120 = vunpack.c.l.b16 %v40
    %v121 = vunpack.c.l.b16 %v41
    %v122 = vunpack.c.l.b16 %v42
    %v123 = vunpack.c.l.b16 %v43
    %v124 = vunpack.c.l.b16 %v44
    %v125 = vunpack.c.l.b16 %v45
    %v126 = vunpack.c.l.b16 %v46
    %v127 = vunpack.c.l.b16 %v47
    %v128 = vunpack.c.l.b16 %v48
    %v129 = vunpack.c.l.b16 %v49
    %v130 = vunpack.c.l.b16 %v50
    %v131 = vunpack.c.l.b16 %v51
    %v132 = vpack.c.b16 %v117, %v116
    %v133 = vpack.c.b16 %v119, %v118
    %v134 = vpack.c.b16 %v121, %v120
    %v135 = vpack.c.b16 %v123, %v122
    %v136 = vpack.c.b16 %v125, %v124
    %v137 = vpack.c.b16 %v127, %v126
    %v138 = vpack.c.b16 %v129, %v128
    %v139 = vpack.c.b16 %v131, %v130
    %148 = vmatprep.subr.bf16.mxu0 0
    %149 = vmatpush1.bf16.msra.mxu0 %v132
    %150 = vmatprep.subr.bf16.mxu0 0
    %151 = vmatpush1.bf16.msra.mxu0 %v133
    %152 = vmatprep.subr.bf16.mxu0 0
    %153 = vmatpush1.bf16.msra.mxu0 %v134
    %154 = vmatprep.subr.bf16.mxu0 0
    %155 = vmatpush1.bf16.msra.mxu0 %v135
    %156 = vmatprep.subr.bf16.mxu0 0
    %157 = vmatpush1.bf16.msra.mxu0 %v136
    %158 = vmatprep.subr.bf16.mxu0 0
    %159 = vmatpush1.bf16.msra.mxu0 %v137
    %160 = vmatprep.subr.bf16.mxu0 0
    %161 = vmatpush1.bf16.msra.mxu0 %v138
    %162 = vmatprep.subr.bf16.mxu0 0
    %163 = vmatpush1.bf16.msra.mxu0 %v139
    %164 = vmatprep.subr.bf16.mxu0 0
    %165 = vmatpush1.bf16.msra.mxu0 0
    %166 = vmatprep.subr.bf16.mxu0 0
    %167 = vmatpush1.bf16.msra.mxu0 0
    %168 = vmatprep.subr.bf16.mxu0 0
    %169 = vmatpush1.bf16.msra.mxu0 0
    %170 = vmatprep.subr.bf16.mxu0 0
    %171 = vmatpush1.bf16.msra.mxu0 0
    %172 = vmatprep.subr.bf16.mxu0 0
    %173 = vmatpush1.bf16.msra.mxu0 0
    %174 = vmatprep.subr.bf16.mxu0 0
    %175 = vmatpush1.bf16.msra.mxu0 0
    %176 = vmatprep.subr.bf16.mxu0 0
    %177 = vmatpush1.bf16.msra.mxu0 0
    %178 = vmatprep.subr.bf16.mxu0 0
    %179 = vmatpush1.bf16.msra.mxu0 0
    %180 = vmatprep.mubr.bf16.mxu0 0
    %181 = vmatmul.mubr.bf16.gmra.mrb[0].mxu0 %v84
    %v182 = vpop.f32.mrb[0].mxu0
    %v183 = vadd.f32 0.0, %v182
    %v184 = vpop.f32.mrb[0].mxu0
    %v185 = vpop.f32.mrb[0].mxu0
    %v186 = vadd.f32 0.0, %v185
    %v187 = vpop.f32.mrb[0].mxu0
    %188 = vmatprep.mubr.bf16.mxu0 0
    %189 = vmatmul.mubr.bf16.gmra.mrb[0].mxu0 %v85
    %v190 = vpop.f32.mrb[0].mxu0
    %v191 = vadd.f32 0.0, %v190
    %v192 = vpop.f32.mrb[0].mxu0
    %v193 = vpop.f32.mrb[0].mxu0
    %v194 = vadd.f32 0.0, %v193
    %v195 = vpop.f32.mrb[0].mxu0
    %196 = vmatprep.mubr.bf16.mxu0 0
    %197 = vmatmul.mubr.bf16.gmra.mrb[0].mxu0 %v86
    %v198 = vpop.f32.mrb[0].mxu0
    %v199 = vadd.f32 0.0, %v198
    %v200 = vpop.f32.mrb[0].mxu0
    %v201 = vpop.f32.mrb[0].mxu0
    %v202 = vadd.f32 0.0, %v201
    %v203 = vpop.f32.mrb[0].mxu0
    %204 = vmatprep.mubr.bf16.mxu0 0
    %205 = vmatmul.mubr.bf16.gmra.mrb[0].mxu0 %v87
    %v206 = vpop.f32.mrb[0].mxu0
    %v207 = vadd.f32 0.0, %v206
    %v208 = vpop.f32.mrb[0].mxu0
    %v209 = vpop.f32.mrb[0].mxu0
    %v210 = vadd.f32 0.0, %v209
    %v211 = vpop.f32.mrb[0].mxu0
    %212 = vmatprep.mubr.bf16.mxu0 0
    %213 = vmatmul.mubr.bf16.gmra.mrb[0].mxu0 %v88
    %v214 = vpop.f32.mrb[0].mxu0
    %v215 = vadd.f32 0.0, %v214
    %v216 = vpop.f32.mrb[0].mxu0
    %v217 = vpop.f32.mrb[0].mxu0
    %v218 = vadd.f32 0.0, %v217
    %v219 = vpop.f32.mrb[0].mxu0
    %220 = vmatprep.mubr.bf16.mxu0 0
    %221 = vmatmul.mubr.bf16.gmra.mrb[0].mxu0 %v89
    %v222 = vpop.f32.mrb[0].mxu0
    %v223 = vadd.f32 0.0, %v222
    %v224 = vpop.f32.mrb[0].mxu0
    %v225 = vpop.f32.mrb[0].mxu0
    %v226 = vadd.f32 0.0, %v225
    %v227 = vpop.f32.mrb[0].mxu0
    %228 = vmatprep.mubr.bf16.mxu0 0
    %229 = vmatmul.mubr.bf16.gmra.mrb[0].mxu0 %v90
    %v230 = vpop.f32.mrb[0].mxu0
    %v231 = vadd.f32 0.0, %v230
    %v232 = vpop.f32.mrb[0].mxu0
    %v233 = vpop.f32.mrb[0].mxu0
    %v234 = vadd.f32 0.0, %v233
    %v235 = vpop.f32.mrb[0].mxu0
    %236 = vmatprep.mubr.bf16.mxu0 0
    %237 = vmatmul.mubr.bf16.gmra.mrb[0].mxu0 %v91
    %v238 = vpop.f32.mrb[0].mxu0
    %v239 = vadd.f32 0.0, %v238
    %v240 = vpop.f32.mrb[0].mxu0
    %v241 = vpop.f32.mrb[0].mxu0
    %v242 = vadd.f32 0.0, %v241
    %v243 = vpop.f32.mrb[0].mxu0
    %244 = vdwg.mxu0
    %p245 = scmp.eq.s32.totalorder 0, 0
    // Predicated region
    $region18: #{tpu_custom_call.1} parent=1 // pred_check
      %p246 = pneg %p245
    $region19: #{tpu_custom_call.1} parent=1 // pred_check_branch
      %248 = sbr.rel (%p246) target = $region21
    $region20: #{tpu_custom_call.1} parent=1 // pred_region
      %v249 = vld [vmem:[%s2] sm:$0xff]
      %v250 = vld [vmem:[%s2 + $0x8] sm:$0xff]
      %v251 = vld [vmem:[%s2 + $0x10] sm:$0xff]
      %v252 = vld [vmem:[%s2 + $0x18] sm:$0xff]
      %v253 = vld [vmem:[%s2 + $0x20] sm:$0xff]
      %v254 = vld [vmem:[%s2 + $0x28] sm:$0xff]
      %v255 = vld [vmem:[%s2 + $0x30] sm:$0xff]
      %v256 = vld [vmem:[%s2 + $0x38] sm:$0xff]
      %v257 = vld [vmem:[%s2 + $0x40] sm:$0xff]
      %v258 = vld [vmem:[%s2 + $0x48] sm:$0xff]
      %v259 = vld [vmem:[%s2 + $0x50] sm:$0xff]
      %v260 = vld [vmem:[%s2 + $0x58] sm:$0xff]
      %v261 = vld [vmem:[%s2 + $0x60] sm:$0xff]
      %v262 = vld [vmem:[%s2 + $0x68] sm:$0xff]
      %v263 = vld [vmem:[%s2 + $0x70] sm:$0xff]
      %v264 = vld [vmem:[%s2 + $0x78] sm:$0xff]
      %266 = vset.pattern.permute.xlu0 0
      %267 = vperm.xlu0 %266, %v249
      %v268 = vpop.permute.xlu0 %267
      %271 = vset.pattern.permute.xlu0 0
      %272 = vperm.xlu0 %271, %v250
      %v273 = vpop.permute.xlu0 %272
      %276 = vset.pattern.permute.xlu0 0
      %277 = vperm.xlu0 %276, %v251
      %v278 = vpop.permute.xlu0 %277
      %281 = vset.pattern.permute.xlu0 0
      %282 = vperm.xlu0 %281, %v252
      %v283 = vpop.permute.xlu0 %282
      %286 = vset.pattern.permute.xlu0 0
      %287 = vperm.xlu0 %286, %v253
      %v288 = vpop.permute.xlu0 %287
      %291 = vset.pattern.permute.xlu0 0
      %292 = vperm.xlu0 %291, %v254
      %v293 = vpop.permute.xlu0 %292
      %296 = vset.pattern.permute.xlu0 0
      %297 = vperm.xlu0 %296, %v255
      %v298 = vpop.permute.xlu0 %297
      %301 = vset.pattern.permute.xlu0 0
      %302 = vperm.xlu0 %301, %v256
      %v303 = vpop.permute.xlu0 %302
      %306 = vset.pattern.permute.xlu0 0
      %307 = vperm.xlu0 %306, %v257
      %v308 = vpop.permute.xlu0 %307
      %311 = vset.pattern.permute.xlu0 0
      %312 = vperm.xlu0 %311, %v258
      %v313 = vpop.permute.xlu0 %312
      %316 = vset.pattern.permute.xlu0 0
      %317 = vperm.xlu0 %316, %v259
      %v318 = vpop.permute.xlu0 %317
      %321 = vset.pattern.permute.xlu0 0
      %322 = vperm.xlu0 %321, %v260
      %v323 = vpop.permute.xlu0 %322
      %326 = vset.pattern.permute.xlu0 0
      %327 = vperm.xlu0 %326, %v261
      %v328 = vpop.permute.xlu0 %327
      %331 = vset.pattern.permute.xlu0 0
      %332 = vperm.xlu0 %331, %v262
      %v333 = vpop.permute.xlu0 %332
      %336 = vset.pattern.permute.xlu0 0
      %337 = vperm.xlu0 %336, %v263
      %v338 = vpop.permute.xlu0 %337
      %341 = vset.pattern.permute.xlu0 0
      %342 = vperm.xlu0 %341, %v264
      %v343 = vpop.permute.xlu0 %342
      %v345 = vadd.f32 %v183, %v268
      %v346 = vadd.f32 %v186, %v273
      %v347 = vadd.f32 %v191, %v278
      %v348 = vadd.f32 %v194, %v283
      %v349 = vadd.f32 %v199, %v288
      %v350 = vadd.f32 %v202, %v293
      %v351 = vadd.f32 %v207, %v298
      %v352 = vadd.f32 %v210, %v303
      %v353 = vadd.f32 %v215, %v308
      %v354 = vadd.f32 %v218, %v313
      %v355 = vadd.f32 %v223, %v318
      %v356 = vadd.f32 %v226, %v323
      %v357 = vadd.f32 %v231, %v328
      %v358 = vadd.f32 %v234, %v333
      %v359 = vadd.f32 %v239, %v338
      %v360 = vadd.f32 %v242, %v343
      %361 = vst [vmem:[#allocation2] sm:$0xff] %v345
      %362 = vst [vmem:[#allocation2 + $0x8] sm:$0xff] %v346
      %363 = vst [vmem:[#allocation2 + $0x10] sm:$0xff] %v347
      %364 = vst [vmem:[#allocation2 + $0x18] sm:$0xff] %v348
      %365 = vst [vmem:[#allocation2 + $0x20] sm:$0xff] %v349
      %366 = vst [vmem:[#allocation2 + $0x28] sm:$0xff] %v350
      %367 = vst [vmem:[#allocation2 + $0x30] sm:$0xff] %v351
      %368 = vst [vmem:[#allocation2 + $0x38] sm:$0xff] %v352
      %369 = vst [vmem:[#allocation2 + $0x40] sm:$0xff] %v353
      %370 = vst [vmem:[#allocation2 + $0x48] sm:$0xff] %v354
      %371 = vst [vmem:[#allocation2 + $0x50] sm:$0xff] %v355
      %372 = vst [vmem:[#allocation2 + $0x58] sm:$0xff] %v356
      %373 = vst [vmem:[#allocation2 + $0x60] sm:$0xff] %v357
      %374 = vst [vmem:[#allocation2 + $0x68] sm:$0xff] %v358
      %375 = vst [vmem:[#allocation2 + $0x70] sm:$0xff] %v359
      %376 = vst [vmem:[#allocation2 + $0x78] sm:$0xff] %v360
    $region21: #{tpu_custom_call.1} parent=1 // pred_fallthru
      _
    %p377 = scmp.gt.s32.totalorder 0, 0
    // Predicated region
    $region22: #{tpu_custom_call.1} parent=1 // pred_check
      %p378 = pneg %p377
    $region23: #{tpu_custom_call.1} parent=1 // pred_check_branch
      %380 = sbr.rel (%p378) target = $region25
    $region24: #{tpu_custom_call.1} parent=1 // pred_region
      %v381 = vld [vmem:[#allocation2] sm:$0xff]
      %v382 = vld [vmem:[#allocation2 + $0x8] sm:$0xff]
      %v383 = vld [vmem:[#allocation2 + $0x10] sm:$0xff]
      %v384 = vld [vmem:[#allocation2 + $0x18] sm:$0xff]
      %v385 = vld [vmem:[#allocation2 + $0x20] sm:$0xff]
      %v386 = vld [vmem:[#allocation2 + $0x28] sm:$0xff]
      %v387 = vld [vmem:[#allocation2 + $0x30] sm:$0xff]
      %v388 = vld [vmem:[#allocation2 + $0x38] sm:$0xff]
      %v389 = vld [vmem:[#allocation2 + $0x40] sm:$0xff]
      %v390 = vld [vmem:[#allocation2 + $0x48] sm:$0xff]
      %v391 = vld [vmem:[#allocation2 + $0x50] sm:$0xff]
      %v392 = vld [vmem:[#allocation2 + $0x58] sm:$0xff]
      %v393 = vld [vmem:[#allocation2 + $0x60] sm:$0xff]
      %v394 = vld [vmem:[#allocation2 + $0x68] sm:$0xff]
      %v395 = vld [vmem:[#allocation2 + $0x70] sm:$0xff]
      %v396 = vld [vmem:[#allocation2 + $0x78] sm:$0xff]
      %v397 = vadd.f32 %v381, %v183
      %v398 = vadd.f32 %v382, %v186
      %v399 = vadd.f32 %v383, %v191
      %v400 = vadd.f32 %v384, %v194
      %v401 = vadd.f32 %v385, %v199
      %v402 = vadd.f32 %v386, %v202
      %v403 = vadd.f32 %v387, %v207
      %v404 = vadd.f32 %v388, %v210
      %v405 = vadd.f32 %v389, %v215
      %v406 = vadd.f32 %v390, %v218
      %v407 = vadd.f32 %v391, %v223
      %v408 = vadd.f32 %v392, %v226
      %v409 = vadd.f32 %v393, %v231
      %v410 = vadd.f32 %v394, %v234
      %v411 = vadd.f32 %v395, %v239
      %v412 = vadd.f32 %v396, %v242
      %413 = vst [vmem:[#allocation2] sm:$0xff] %v397
      %414 = vst [vmem:[#allocation2 + $0x8] sm:$0xff] %v398
      %415 = vst [vmem:[#allocation2 + $0x10] sm:$0xff] %v399
      %416 = vst [vmem:[#allocation2 + $0x18] sm:$0xff] %v400
      %417 = vst [vmem:[#allocation2 + $0x20] sm:$0xff] %v401
      %418 = vst [vmem:[#allocation2 + $0x28] sm:$0xff] %v402
      %419 = vst [vmem:[#allocation2 + $0x30] sm:$0xff] %v403
      %420 = vst [vmem:[#allocation2 + $0x38] sm:$0xff] %v404
      %421 = vst [vmem:[#allocation2 + $0x40] sm:$0xff] %v405
      %422 = vst [vmem:[#allocation2 + $0x48] sm:$0xff] %v406
      %423 = vst [vmem:[#allocation2 + $0x50] sm:$0xff] %v407
      %424 = vst [vmem:[#allocation2 + $0x58] sm:$0xff] %v408
      %425 = vst [vmem:[#allocation2 + $0x60] sm:$0xff] %v409
      %426 = vst [vmem:[#allocation2 + $0x68] sm:$0xff] %v410
      %427 = vst [vmem:[#allocation2 + $0x70] sm:$0xff] %v411
      %428 = vst [vmem:[#allocation2 + $0x78] sm:$0xff] %v412
    $region25: #{tpu_custom_call.1} parent=1 // pred_fallthru
      _
    // Predicated region
    $region26: #{tpu_custom_call.1} parent=1 // pred_check
      %p429 = pneg %p245
    $region27: #{tpu_custom_call.1} parent=1 // pred_check_branch
      %431 = sbr.rel (%p429) target = $region29
    $region28: #{tpu_custom_call.1} parent=1 // pred_region
      %v432 = vld [vmem:[#allocation2] sm:$0xff]
      %v433 = vld [vmem:[#allocation2 + $0x8] sm:$0xff]
      %v434 = vld [vmem:[#allocation2 + $0x10] sm:$0xff]
      %v435 = vld [vmem:[#allocation2 + $0x18] sm:$0xff]
      %v436 = vld [vmem:[#allocation2 + $0x20] sm:$0xff]
      %v437 = vld [vmem:[#allocation2 + $0x28] sm:$0xff]
      %v438 = vld [vmem:[#allocation2 + $0x30] sm:$0xff]
      %v439 = vld [vmem:[#allocation2 + $0x38] sm:$0xff]
      %v440 = vld [vmem:[#allocation2 + $0x40] sm:$0xff]
      %v441 = vld [vmem:[#allocation2 + $0x48] sm:$0xff]
      %v442 = vld [vmem:[#allocation2 + $0x50] sm:$0xff]
      %v443 = vld [vmem:[#allocation2 + $0x58] sm:$0xff]
      %v444 = vld [vmem:[#allocation2 + $0x60] sm:$0xff]
      %v445 = vld [vmem:[#allocation2 + $0x68] sm:$0xff]
      %v446 = vld [vmem:[#allocation2 + $0x70] sm:$0xff]
      %v447 = vld [vmem:[#allocation2 + $0x78] sm:$0xff]
      %v448 = vmax.f32 %v432, 0.0
      %v449 = vmax.f32 %v433, 0.0
      %v450 = vmax.f32 %v434, 0.0
      %v451 = vmax.f32 %v435, 0.0
      %v452 = vmax.f32 %v436, 0.0
      %v453 = vmax.f32 %v437, 0.0
      %v454 = vmax.f32 %v438, 0.0
      %v455 = vmax.f32 %v439, 0.0
      %v456 = vmax.f32 %v440, 0.0
      %v457 = vmax.f32 %v441, 0.0
      %v458 = vmax.f32 %v442, 0.0
      %v459 = vmax.f32 %v443, 0.0
      %v460 = vmax.f32 %v444, 0.0
      %v461 = vmax.f32 %v445, 0.0
      %v462 = vmax.f32 %v446, 0.0
      %v463 = vmax.f32 %v447, 0.0
      %v464 = vld [vmem:[%s2] sm:$0xff]
      %v465 = vld [vmem:[%s2 + $0x8] sm:$0xff]
      %v466 = vld [vmem:[%s2 + $0x10] sm:$0xff]
      %v467 = vld [vmem:[%s2 + $0x18] sm:$0xff]
      %v468 = vld [vmem:[%s2 + $0x20] sm:$0xff]
      %v469 = vld [vmem:[%s2 + $0x28] sm:$0xff]
      %v470 = vld [vmem:[%s2 + $0x30] sm:$0xff]
      %v471 = vld [vmem:[%s2 + $0x38] sm:$0xff]
      %v472 = vld [vmem:[%s2 + $0x40] sm:$0xff]
      %v473 = vld [vmem:[%s2 + $0x48] sm:$0xff]
      %v474 = vld [vmem:[%s2 + $0x50] sm:$0xff]
      %v475 = vld [vmem:[%s2 + $0x58] sm:$0xff]
      %v476 = vld [vmem:[%s2 + $0x60] sm:$0xff]
      %v477 = vld [vmem:[%s2 + $0x68] sm:$0xff]
      %v478 = vld [vmem:[%s2 + $0x70] sm:$0xff]
      %v479 = vld [vmem:[%s2 + $0x78] sm:$0xff]
      %481 = vset.pattern.permute.xlu0 1
      %482 = vperm.xlu0 %481, %v464
      %v483 = vpop.permute.xlu0 %482
      %486 = vset.pattern.permute.xlu0 1
      %487 = vperm.xlu0 %486, %v465
      %v488 = vpop.permute.xlu0 %487
      %491 = vset.pattern.permute.xlu0 1
      %492 = vperm.xlu0 %491, %v466
      %v493 = vpop.permute.xlu0 %492
      %496 = vset.pattern.permute.xlu0 1
      %497 = vperm.xlu0 %496, %v467
      %v498 = vpop.permute.xlu0 %497
      %501 = vset.pattern.permute.xlu0 1
      %502 = vperm.xlu0 %501, %v468
      %v503 = vpop.permute.xlu0 %502
      %506 = vset.pattern.permute.xlu0 1
      %507 = vperm.xlu0 %506, %v469
      %v508 = vpop.permute.xlu0 %507
      %511 = vset.pattern.permute.xlu0 1
      %512 = vperm.xlu0 %511, %v470
      %v513 = vpop.permute.xlu0 %512
      %516 = vset.pattern.permute.xlu0 1
      %517 = vperm.xlu0 %516, %v471
      %v518 = vpop.permute.xlu0 %517
      %521 = vset.pattern.permute.xlu0 1
      %522 = vperm.xlu0 %521, %v472
      %v523 = vpop.permute.xlu0 %522
      %526 = vset.pattern.permute.xlu0 1
      %527 = vperm.xlu0 %526, %v473
      %v528 = vpop.permute.xlu0 %527
      %531 = vset.pattern.permute.xlu0 1
      %532 = vperm.xlu0 %531, %v474
      %v533 = vpop.permute.xlu0 %532
      %536 = vset.pattern.permute.xlu0 1
      %537 = vperm.xlu0 %536, %v475
      %v538 = vpop.permute.xlu0 %537
      %541 = vset.pattern.permute.xlu0 1
      %542 = vperm.xlu0 %541, %v476
      %v543 = vpop.permute.xlu0 %542
      %546 = vset.pattern.permute.xlu0 1
      %547 = vperm.xlu0 %546, %v477
      %v548 = vpop.permute.xlu0 %547
      %551 = vset.pattern.permute.xlu0 1
      %552 = vperm.xlu0 %551, %v478
      %v553 = vpop.permute.xlu0 %552
      %556 = vset.pattern.permute.xlu0 1
      %557 = vperm.xlu0 %556, %v479
      %v558 = vpop.permute.xlu0 %557
      %v560 = vmul.f32 %v448, %v483
      %v561 = vmul.f32 %v449, %v488
      %v562 = vmul.f32 %v450, %v493
      %v563 = vmul.f32 %v451, %v498
      %v564 = vmul.f32 %v452, %v503
      %v565 = vmul.f32 %v453, %v508
      %v566 = vmul.f32 %v454, %v513
      %v567 = vmul.f32 %v455, %v518
      %v568 = vmul.f32 %v456, %v523
      %v569 = vmul.f32 %v457, %v528
      %v570 = vmul.f32 %v458, %v533
      %v571 = vmul.f32 %v459, %v538
      %v572 = vmul.f32 %v460, %v543
      %v573 = vmul.f32 %v461, %v548
      %v574 = vmul.f32 %v462, %v553
      %v575 = vmul.f32 %v463, %v558
      %v576 = vadd.f32 %v560, %v561
      %v577 = vadd.f32 %v576, %v562
      %v578 = vadd.f32 %v577, %v563
      %v579 = vadd.f32 %v578, %v564
      %v580 = vadd.f32 %v579, %v565
      %v581 = vadd.f32 %v580, %v566
      %v582 = vadd.f32 %v581, %v567
      %v583 = vadd.f32 %v582, %v568
      %v584 = vadd.f32 %v583, %v569
      %v585 = vadd.f32 %v584, %v570
      %v586 = vadd.f32 %v585, %v571
      %v587 = vadd.f32 %v586, %v572
      %v588 = vadd.f32 %v587, %v573
      %v589 = vadd.f32 %v588, %v574
      %v590 = vadd.f32 %v589, %v575
      %v591 = vrot.slane %v590, 4
      %v592 = vadd.f32 %v590, %v591
      %v593 = vrot.slane %v592, 2
      %v594 = vadd.f32 %v592, %v593
      %v595 = vrot.slane %v594, 1
      %v596 = vadd.f32 %v594, %v595
      %p597 = scmp.eq.s32.totalorder 0, 0
      // Predicated region
      $region30: #{tpu_custom_call.1} parent=28 // pred_check
        %p598 = pneg %p597
      $region31: #{tpu_custom_call.1} parent=28 // pred_check_branch
        %600 = sbr.rel (%p598) target = $region33
      $region32: #{tpu_custom_call.1} parent=28 // pred_region
        %s601 = sld [smem:[#allocation4]]
        %v602 = vstv %s601
        %v603 = vadd.f32 %v596, %v602
        %604 = vst [vmem:[#allocation3] sm:$0x1] %v603
      $region33: #{tpu_custom_call.1} parent=28 // pred_fallthru
        _
      %p605 = scmp.gt.s32.totalorder 0, 0
      // Predicated region
      $region34: #{tpu_custom_call.1} parent=28 // pred_check
        %p606 = pneg %p605
      $region35: #{tpu_custom_call.1} parent=28 // pred_check_branch
        %608 = sbr.rel (%p606) target = $region37
      $region36: #{tpu_custom_call.1} parent=28 // pred_region
        %v609 = vld [vmem:[#allocation3] sm:$0x1]
        %v610 = vadd.f32 %v609, %v596
        %611 = vst [vmem:[#allocation3] sm:$0x1] %v610
      $region37: #{tpu_custom_call.1} parent=28 // pred_fallthru
        _
      // Predicated region
      $region38: #{tpu_custom_call.1} parent=28 // pred_check
        %p612 = pneg %p597
      $region39: #{tpu_custom_call.1} parent=28 // pred_check_branch
        %614 = sbr.rel (%p612) target = $region41
      $region40: #{tpu_custom_call.1} parent=28 // pred_region
        %v615 = vld [vmem:[#allocation3] sm:$0x1]
        %v616 = vsub.f32 0.0, %v615
        %v617 = vmul.f32 %v616, 1.442695
        %v618 = vpow.pop %v617
        %v619 = vadd.f32 %v618, 1.0
        %v620 = vrcp.pop %v619
        %v621 = vmul.f32 1.0, %v620
        %622 = vst [vmem:[#allocation5] sm:$0x1] %v621
      $region41: #{tpu_custom_call.1} parent=28 // pred_fallthru
        _
    $region29: #{tpu_custom_call.1} parent=1 // pred_fallthru
      _
    // Predicated region
    $region42: #{tpu_custom_call.1} parent=1 // pred_check
      _
    $region43: #{tpu_custom_call.1} parent=1 // pred_check_branch
      %624 = sbr.rel (0) target = $region45
    $region44: #{tpu_custom_call.1} parent=1 // pred_region
      %s626 = ssub.s32 16, 16
      %627 = vsyncadd [#allocation6], %s626
      %s629 = sshll.u32 [#allocation5], 4
      %s630 = int_to_ptr.vmem [resolvable:$true] %s629
      %632 = dma.vmem_to_hbm [thread:$0]  %s630, 16, %s4, [#allocation6]
    $region45: #{tpu_custom_call.1} parent=1 // pred_fallthru
      _
    // Predicated region
    $region46: #{tpu_custom_call.1} parent=1 // pred_check
      _
    $region47: #{tpu_custom_call.1} parent=1 // pred_check_branch
      %634 = sbr.rel (0) target = $region49
    $region48: #{tpu_custom_call.1} parent=1 // pred_region
      %635 = dma.done [#allocation6], 16
    $region49: #{tpu_custom_call.1} parent=1 // pred_fallthru
      _
    %636 = vsyncpa [#allocation6], 1

</llo_original>
